<compile_context>
chip_gen: v6e
topology: v6e:2x2x1
jax: 0.10.0
libtpu: 0.0.40
codegen_flags: <defaults>
</compile_context>

<pallas_src>
import functools
import math

import jax
import jax.numpy as jnp
import numpy as np
from jax.experimental import pallas as pl
from jax.experimental.pallas import tpu as pltpu

LN_EPS = 1e-5
_VMEM = pl.BlockSpec(memory_space=pltpu.MemorySpace.VMEM)


def _layernorm(x, gamma, beta):
    mu = jnp.mean(x, axis=-1, keepdims=True)
    xc = x - mu
    var = jnp.mean(xc * xc, axis=-1, keepdims=True)
    return xc * jax.lax.rsqrt(var + LN_EPS) * gamma + beta


def _encode(x, w_lin, b_lin, w_b1, b_b1, w_b2, b_b2, ln_g, ln_b, w_k, b_k):
    """Linear -> block0 (Linear-ReLU-Linear, residual; prenorm=False) -> LN -> K."""
    h = jnp.dot(x, w_lin, preferred_element_type=jnp.float32) + b_lin
    t = jnp.maximum(jnp.dot(h, w_b1, preferred_element_type=jnp.float32) + b_b1, 0.0)
    h = h + jnp.dot(t, w_b2, preferred_element_type=jnp.float32) + b_b2
    hn = _layernorm(h, ln_g, ln_b)
    k = jnp.dot(hn, w_k, preferred_element_type=jnp.float32) + b_k
    return h, k


# ----------------------- candidate encoding: cand_k and |cand_k|^2 row -----------------------
def _encode_candidates_kernel(x_ref, w_lin_ref, b_lin_ref,
                              w_b1_ref, b_b1_ref, w_b2_ref, b_b2_ref,
                              ln_g_ref, ln_b_ref, w_k_ref, b_k_ref,
                              k_out_ref, k2_out_ref):
    _, k = _encode(x_ref[...], w_lin_ref[...], b_lin_ref[...],
                   w_b1_ref[...], b_b1_ref[...], w_b2_ref[...], b_b2_ref[...],
                   ln_g_ref[...], ln_b_ref[...], w_k_ref[...], b_k_ref[...])
    k_out_ref[...] = k
    # |k_n|^2 built directly as a (1, N) lane-dense row via a ones-vector matmul
    # (avoids an XLU (N,1)->(1,N) transpose downstream).
    k2_out_ref[...] = jax.lax.dot_general(
        jnp.ones((1, k.shape[1]), jnp.float32), k * k,
        (((1,), (1,)), ((), ())), preferred_element_type=jnp.float32)


def encode_candidates(cand_x, p):
    n = cand_x.shape[0]
    d_main = p['w_k_t'].shape[1]
    args = (cand_x, p['w_lin_t'], p['b_lin'], p['w_b01_t'], p['b_b01'],
            p['w_b02_t'], p['b_b02'], p['ln_g'], p['ln_b'], p['w_k_t'], p['b_k'])
    return pl.pallas_call(
        _encode_candidates_kernel,
        out_shape=(jax.ShapeDtypeStruct((n, d_main), jnp.float32),
                   jax.ShapeDtypeStruct((1, n), jnp.float32)),
        in_specs=[_VMEM] * len(args),
        out_specs=(_VMEM, _VMEM),
    )(*args)


# --------------- fused: encode(x) + retrieval (top-C) + mixer + predictor + head ---------------
def _fused_forward_kernel(x_ref, ck_ref, ck2_ref, cy_ref,
                          w_lin_ref, b_lin_ref, w_b1_ref, b_b1_ref, w_b2_ref, b_b2_ref,
                          ln_g_ref, ln_b_ref, w_k_ref, b_k_ref,
                          w_le_ref, b_le_ref, w_t1_ref, b_t1_ref, w_t2_ref,
                          p_lng_ref, p_lnb_ref, w_p1_ref, b_p1_ref, w_p2_ref, b_p2_ref,
                          h_lng_ref, h_lnb_ref, w_h_ref, b_h_ref,
                          out_ref, *, context_size):
    ck = ck_ref[...]                           # (N, d) candidate keys
    ck2 = ck2_ref[...]                         # (1, N) |ck|^2
    cy = cy_ref[...]                           # (1, N) candidate labels (regression)

    # ---- encode(x) ----
    x, k = _encode(x_ref[...], w_lin_ref[...], b_lin_ref[...],
                   w_b1_ref[...], b_b1_ref[...], w_b2_ref[...], b_b2_ref[...],
                   ln_g_ref[...], ln_b_ref[...], w_k_ref[...], b_k_ref[...])

    B = x.shape[0]
    N = ck.shape[0]
    C = context_size

    # ---- shifted similarity 2 k.ck_n - |ck_n|^2 : the -|k|^2 term is a per-row
    #      constant, so both the top-k ranking and the softmax are unchanged. ----
    sim_all = 2.0 * jax.lax.dot_general(
        k, ck, (((1,), (1,)), ((), ())), preferred_element_type=jnp.float32) - ck2   # (B, N)

    # ---- in-kernel top-C nearest neighbours (iterative argmax, lowest-index tie-break)
    # TODO(synk): faiss.IndexFlatL2.search replaced by exact in-kernel top-k selection.
    iota_f = jax.lax.broadcasted_iota(jnp.float32, (B, N), 1)
    neg = jnp.float32(-3.0e38)
    remaining = sim_all
    sims = []       # selected similarity values, descending order
    onehots = []    # (B, N) float32 one-hot selection masks
    for _ in range(C):
        m = jnp.max(remaining, axis=-1, keepdims=True)                         # (B, 1)
        idx = jnp.min(jnp.where(remaining == m, iota_f, jnp.float32(N)),
                      axis=-1, keepdims=True)                                  # (B, 1)
        sel = iota_f == idx
        onehots.append(jnp.where(sel, 1.0, 0.0))
        sims.append(m)
        remaining = jnp.where(sel, neg, remaining)

    # ---- softmax over the C selected sims (sims[0] is the row max by construction);
    #      divide goes to the EUP via approximate reciprocal. context_dropout = eval id.
    exps = [jnp.exp(s - sims[0]) for s in sims]            # (B, 1) each, exps[0] == 1
    denom = exps[0]
    for e in exps[1:]:
        denom = denom + e
    inv = pl.reciprocal(denom, approx=True)
    probs = [e * inv for e in exps]                        # list of (B, 1)

    # ---- batched context gather + value MLP: one (C*B, N) one-hot matmul gather and
    #      ONE pair of T() matmuls instead of 2*C tiny ones. ----
    sel_all = jnp.concatenate(onehots, axis=0)                                 # (C*B, N)
    ck_sel = jnp.dot(sel_all, ck, preferred_element_type=jnp.float32)          # (C*B, d)
    cy_sel = jnp.sum(sel_all * cy, axis=-1, keepdims=True)                     # (C*B, 1)
    k_rep = jnp.concatenate([k] * C, axis=0)                                   # (C*B, d)
    diff = k_rep - ck_sel
    tt = jnp.maximum(
        jnp.dot(diff, w_t1_ref[...], preferred_element_type=jnp.float32) + b_t1_ref[...], 0.0)
    vals = (cy_sel * w_le_ref[...] + b_le_ref[...]                             # label_encoder
            + jnp.dot(tt, w_t2_ref[...], preferred_element_type=jnp.float32))  # (C*B, d)

    ctx = jnp.zeros_like(k)
    for c in range(C):
        ctx = ctx + probs[c] * vals[c * B:(c + 1) * B, :]

    h = x + ctx

    # ---- predictor block (prenorm=True): LN -> Linear -> ReLU -> Linear, residual ----
    hn = _layernorm(h, p_lng_ref[...], p_lnb_ref[...])
    tt = jnp.maximum(
        jnp.dot(hn, w_p1_ref[...], preferred_element_type=jnp.float32) + b_p1_ref[...], 0.0)
    h = h + jnp.dot(tt, w_p2_ref[...], preferred_element_type=jnp.float32) + b_p2_ref[...]

    # ---- head: LN -> ReLU -> Linear(d_main, 1), done as VPU multiply + lane reduce
    #      (d_out == 1: a single-column MXU dot would waste the array and force a
    #       masked-store epilogue anyway). ----
    hn = jnp.maximum(_layernorm(h, h_lng_ref[...], h_lnb_ref[...]), 0.0)
    out_ref[...] = jnp.sum(hn * w_h_ref[...], axis=-1, keepdims=True) + b_h_ref[...]


# ------------------------------------- full forward -------------------------------------
def model_forward(x_num, cand_x_num, cand_y, params, context_size):
    # Candidate encoding is its own (cacheable) call; only k and |k|^2 leave the kernel.
    cand_k, cand_k2 = encode_candidates(cand_x_num, params)
    cy_row = cand_y[None, :]                                   # (1, N) lane-dense labels

    args = (x_num, cand_k, cand_k2, cy_row,
            params['w_lin_t'], params['b_lin'], params['w_b01_t'], params['b_b01'],
            params['w_b02_t'], params['b_b02'], params['ln_g'], params['ln_b'],
            params['w_k_t'], params['b_k'],
            params['w_le_row'], params['b_le'],
            params['w_t1_t'], params['b_t1'], params['w_t2_t'],
            params['p_ln_g'], params['p_ln_b'],
            params['w_p1_t'], params['b_p1'], params['w_p2_t'], params['b_p2'],
            params['h_ln_g'], params['h_ln_b'], params['w_h_row'], params['b_h'])
    return pl.pallas_call(
        functools.partial(_fused_forward_kernel, context_size=context_size),
        out_shape=jax.ShapeDtypeStruct((x_num.shape[0], params['b_h'].shape[1]), jnp.float32),
        in_specs=[_VMEM] * len(args),
        out_specs=_VMEM,
    )(*args)


# ---------------------------------- params & reference ----------------------------------
def init_params(key, d_in, d_main, d_block, d_out):
    ks = iter(jax.random.split(key, 24))

    def lin(fan_in, fan_out):
        bound = 1.0 / math.sqrt(fan_in)
        w = jax.random.uniform(next(ks), (fan_out, fan_in), jnp.float32, -bound, bound)
        b = jax.random.uniform(next(ks), (fan_out,), jnp.float32, -bound, bound)
        return w, b

    p = {}
    w, b = lin(d_in, d_main);    p['w_lin_t'] = w.T;  p['b_lin'] = b[None]
    w, b = lin(d_main, d_block); p['w_b01_t'] = w.T;  p['b_b01'] = b[None]
    w, b = lin(d_block, d_main); p['w_b02_t'] = w.T;  p['b_b02'] = b[None]
    p['ln_g'] = jnp.ones((1, d_main), jnp.float32)
    p['ln_b'] = jnp.zeros((1, d_main), jnp.float32)
    w, b = lin(d_main, d_main);  p['w_k_t'] = w.T;    p['b_k'] = b[None]
    # label encoder = nn.Linear(1, d_main), init uniform(-1/sqrt(2), 1/sqrt(2))
    bound = 1.0 / math.sqrt(2.0)
    p['w_le_row'] = jax.random.uniform(next(ks), (1, d_main), jnp.float32, -bound, bound)
    p['b_le'] = jax.random.uniform(next(ks), (1, d_main), jnp.float32, -bound, bound)
    w, b = lin(d_main, d_block); p['w_t1_t'] = w.T;   p['b_t1'] = b[None]
    w, _ = lin(d_block, d_main); p['w_t2_t'] = w.T                     # T's second linear: no bias
    p['p_ln_g'] = jnp.ones((1, d_main), jnp.float32)
    p['p_ln_b'] = jnp.zeros((1, d_main), jnp.float32)
    w, b = lin(d_main, d_block); p['w_p1_t'] = w.T;   p['b_p1'] = b[None]
    w, b = lin(d_block, d_main); p['w_p2_t'] = w.T;   p['b_p2'] = b[None]
    p['h_ln_g'] = jnp.ones((1, d_main), jnp.float32)
    p['h_ln_b'] = jnp.zeros((1, d_main), jnp.float32)
    w, b = lin(d_main, d_out);   p['w_h_row'] = w;    p['b_h'] = b[None]   # (1, d_main), (1, 1)
    return p


def reference_forward(x_num, cand_x_num, cand_y, p, context_size):
    def ln(v, g, b):
        mu = v.mean(-1, keepdims=True)
        var = ((v - mu) ** 2).mean(-1, keepdims=True)
        return (v - mu) / jnp.sqrt(var + LN_EPS) * g + b

    def enc(v):
        h = v @ p['w_lin_t'] + p['b_lin']
        t = jnp.maximum(h @ p['w_b01_t'] + p['b_b01'], 0.0)
        h = h + t @ p['w_b02_t'] + p['b_b02']
        k = ln(h, p['ln_g'], p['ln_b']) @ p['w_k_t'] + p['b_k']
        return h, k

    cand_k = enc(cand_x_num)[1]
    x, k = enc(x_num)
    dist = (jnp.sum(k * k, -1, keepdims=True) - 2.0 * k @ cand_k.T
            + jnp.sum(cand_k * cand_k, -1)[None])
    _, idx = jax.lax.top_k(-dist, context_size)
    ck = cand_k[idx]
    cy = cand_y[idx]
    sim = (-jnp.sum(k * k, -1, keepdims=True)
           + 2.0 * jnp.einsum('bd,bcd->bc', k, ck)
           - jnp.sum(ck * ck, -1))
    probs = jax.nn.softmax(sim, -1)
    cy_emb = cy[..., None] * p['w_le_row'][None] + p['b_le'][None]
    diff = k[:, None, :] - ck
    t = jnp.maximum(jnp.einsum('bcd,de->bce', diff, p['w_t1_t']) + p['b_t1'][None], 0.0)
    v = cy_emb + jnp.einsum('bce,ed->bcd', t, p['w_t2_t'])
    ctx = jnp.einsum('bc,bcd->bd', probs, v)
    h = x + ctx
    hn = ln(h, p['p_ln_g'], p['p_ln_b'])
    t = jnp.maximum(hn @ p['w_p1_t'] + p['b_p1'], 0.0)
    h = h + t @ p['w_p2_t'] + p['b_p2']
    hn = jnp.maximum(ln(h, p['h_ln_g'], p['h_ln_b']), 0.0)
    return jnp.sum(hn * p['w_h_row'], -1, keepdims=True) + p['b_h']


if __name__ == "__main__":
    B, N_CAND, D_IN, D_MAIN, D_BLOCK, D_OUT, CTX = 8, 32, 8, 32, 64, 1, 4

    key = jax.random.PRNGKey(0)
    kp, kx, kc, ky = jax.random.split(key, 4)
    params = init_params(kp, D_IN, D_MAIN, D_BLOCK, D_OUT)

    x_num = jax.random.normal(kx, (B, D_IN), jnp.float32)            # x_['num']
    cand_x_num = jax.random.normal(kc, (N_CAND, D_IN), jnp.float32)  # candidate_x_['num']
    cand_y = jax.random.normal(ky, (N_CAND,), jnp.float32)           # candidate_y (regression)

    out = model_forward(x_num, cand_x_num, cand_y, params, CTX)
    out = jax.block_until_ready(out)

    ref = reference_forward(x_num, cand_x_num, cand_y, params, CTX)
    assert out.shape == (B, D_OUT)
    np.testing.assert_allclose(np.asarray(out), np.asarray(ref), rtol=2e-3, atol=2e-3)

    print("KERNEL_OK")
</pallas_src>

<mosaic_0001>
module attributes {stable_mosaic.version = 11 : i64} {
  func.func @_encode_candidates_kernel(%arg0: memref<32x8xf32, #tpu.memory_space<vmem>>, %arg1: memref<8x32xf32, #tpu.memory_space<vmem>>, %arg2: memref<1x32xf32, #tpu.memory_space<vmem>>, %arg3: memref<32x64xf32, #tpu.memory_space<vmem>>, %arg4: memref<1x64xf32, #tpu.memory_space<vmem>>, %arg5: memref<64x32xf32, #tpu.memory_space<vmem>>, %arg6: memref<1x32xf32, #tpu.memory_space<vmem>>, %arg7: memref<1x32xf32, #tpu.memory_space<vmem>>, %arg8: memref<1x32xf32, #tpu.memory_space<vmem>>, %arg9: memref<32x32xf32, #tpu.memory_space<vmem>>, %arg10: memref<1x32xf32, #tpu.memory_space<vmem>>, %arg11: memref<32x32xf32, #tpu.memory_space<vmem>>, %arg12: memref<1x32xf32, #tpu.memory_space<vmem>>) attributes {dimension_semantics = [], scalar_prefetch = 0 : i64, scratch_operands = 0 : i64, tpu.core_type = #tpu.core_type<tc>} {
    %c0 = arith.constant 0 : index
    %c0_0 = arith.constant 0 : index
    %0 = vector.load %arg0[%c0, %c0_0] : memref<32x8xf32, #tpu.memory_space<vmem>>, vector<32x8xf32>
    %c0_1 = arith.constant 0 : index
    %c0_2 = arith.constant 0 : index
    %1 = vector.load %arg1[%c0_1, %c0_2] : memref<8x32xf32, #tpu.memory_space<vmem>>, vector<8x32xf32>
    %c0_3 = arith.constant 0 : index
    %c0_4 = arith.constant 0 : index
    %2 = vector.load %arg2[%c0_3, %c0_4] : memref<1x32xf32, #tpu.memory_space<vmem>>, vector<1x32xf32>
    %c0_5 = arith.constant 0 : index
    %c0_6 = arith.constant 0 : index
    %3 = vector.load %arg3[%c0_5, %c0_6] : memref<32x64xf32, #tpu.memory_space<vmem>>, vector<32x64xf32>
    %c0_7 = arith.constant 0 : index
    %c0_8 = arith.constant 0 : index
    %4 = vector.load %arg4[%c0_7, %c0_8] : memref<1x64xf32, #tpu.memory_space<vmem>>, vector<1x64xf32>
    %c0_9 = arith.constant 0 : index
    %c0_10 = arith.constant 0 : index
    %5 = vector.load %arg5[%c0_9, %c0_10] : memref<64x32xf32, #tpu.memory_space<vmem>>, vector<64x32xf32>
    %c0_11 = arith.constant 0 : index
    %c0_12 = arith.constant 0 : index
    %6 = vector.load %arg6[%c0_11, %c0_12] : memref<1x32xf32, #tpu.memory_space<vmem>>, vector<1x32xf32>
    %c0_13 = arith.constant 0 : index
    %c0_14 = arith.constant 0 : index
    %7 = vector.load %arg7[%c0_13, %c0_14] : memref<1x32xf32, #tpu.memory_space<vmem>>, vector<1x32xf32>
    %c0_15 = arith.constant 0 : index
    %c0_16 = arith.constant 0 : index
    %8 = vector.load %arg8[%c0_15, %c0_16] : memref<1x32xf32, #tpu.memory_space<vmem>>, vector<1x32xf32>
    %c0_17 = arith.constant 0 : index
    %c0_18 = arith.constant 0 : index
    %9 = vector.load %arg9[%c0_17, %c0_18] : memref<32x32xf32, #tpu.memory_space<vmem>>, vector<32x32xf32>
    %c0_19 = arith.constant 0 : index
    %c0_20 = arith.constant 0 : index
    %10 = vector.load %arg10[%c0_19, %c0_20] : memref<1x32xf32, #tpu.memory_space<vmem>>, vector<1x32xf32>
    %cst = arith.constant dense<0.000000e+00> : vector<32x32xf32>
    %11 = tpu.matmul %0, %1, %cst {dimension_numbers = #tpu.dot_dimension_numbers<[1], [0], [0], [1], [0, 0, 1, 1], [], []>} : vector<32x8xf32>, vector<8x32xf32>, vector<32x32xf32> -> vector<32x32xf32>
    %12 = vector.broadcast %2 : vector<1x32xf32> to vector<32x32xf32>
    %13 = arith.addf %11, %12 : vector<32x32xf32>
    %cst_21 = arith.constant dense<0.000000e+00> : vector<32x64xf32>
    %14 = tpu.matmul %13, %3, %cst_21 {dimension_numbers = #tpu.dot_dimension_numbers<[1], [0], [0], [1], [0, 0, 1, 1], [], []>} : vector<32x32xf32>, vector<32x64xf32>, vector<32x64xf32> -> vector<32x64xf32>
    %15 = vector.broadcast %4 : vector<1x64xf32> to vector<32x64xf32>
    %16 = arith.addf %14, %15 : vector<32x64xf32>
    %cst_22 = arith.constant 0.000000e+00 : f32
    %17 = vector.broadcast %cst_22 : f32 to vector<32x64xf32>
    %18 = arith.maximumf %16, %17 : vector<32x64xf32>
    %cst_23 = arith.constant dense<0.000000e+00> : vector<32x32xf32>
    %19 = tpu.matmul %18, %5, %cst_23 {dimension_numbers = #tpu.dot_dimension_numbers<[1], [0], [0], [1], [0, 0, 1, 1], [], []>} : vector<32x64xf32>, vector<64x32xf32>, vector<32x32xf32> -> vector<32x32xf32>
    %20 = arith.addf %13, %19 : vector<32x32xf32>
    %21 = vector.broadcast %6 : vector<1x32xf32> to vector<32x32xf32>
    %22 = arith.addf %20, %21 : vector<32x32xf32>
    %cst_24 = arith.constant dense<0.000000e+00> : vector<32xf32>
    %23 = vector.multi_reduction <add>, %22, %cst_24 [1] : vector<32x32xf32> to vector<32xf32>
    %24 = vector.shape_cast %23 : vector<32xf32> to vector<32x1xf32>
    %cst_25 = arith.constant 3.200000e+01 : f32
    %25 = vector.broadcast %cst_25 : f32 to vector<32x1xf32>
    %26 = arith.divf %24, %25 : vector<32x1xf32>
    %27 = vector.broadcast %26 : vector<32x1xf32> to vector<32x32xf32>
    %28 = arith.subf %22, %27 : vector<32x32xf32>
    %29 = arith.mulf %28, %28 : vector<32x32xf32>
    %cst_26 = arith.constant dense<0.000000e+00> : vector<32xf32>
    %30 = vector.multi_reduction <add>, %29, %cst_26 [1] : vector<32x32xf32> to vector<32xf32>
    %31 = vector.shape_cast %30 : vector<32xf32> to vector<32x1xf32>
    %cst_27 = arith.constant 3.200000e+01 : f32
    %32 = vector.broadcast %cst_27 : f32 to vector<32x1xf32>
    %33 = arith.divf %31, %32 : vector<32x1xf32>
    %cst_28 = arith.constant 9.99999974E-6 : f32
    %34 = vector.broadcast %cst_28 : f32 to vector<32x1xf32>
    %35 = arith.addf %33, %34 : vector<32x1xf32>
    %36 = math.rsqrt %35 : vector<32x1xf32>
    %37 = vector.broadcast %36 : vector<32x1xf32> to vector<32x32xf32>
    %38 = arith.mulf %28, %37 : vector<32x32xf32>
    %39 = vector.broadcast %7 : vector<1x32xf32> to vector<32x32xf32>
    %40 = arith.mulf %38, %39 : vector<32x32xf32>
    %41 = vector.broadcast %8 : vector<1x32xf32> to vector<32x32xf32>
    %42 = arith.addf %40, %41 : vector<32x32xf32>
    %cst_29 = arith.constant dense<0.000000e+00> : vector<32x32xf32>
    %43 = tpu.matmul %42, %9, %cst_29 {dimension_numbers = #tpu.dot_dimension_numbers<[1], [0], [0], [1], [0, 0, 1, 1], [], []>} : vector<32x32xf32>, vector<32x32xf32>, vector<32x32xf32> -> vector<32x32xf32>
    %44 = vector.broadcast %10 : vector<1x32xf32> to vector<32x32xf32>
    %45 = arith.addf %43, %44 : vector<32x32xf32>
    %c0_30 = arith.constant 0 : index
    %c0_31 = arith.constant 0 : index
    %46 = vector.load %arg11[%c0_30, %c0_31] : memref<32x32xf32, #tpu.memory_space<vmem>>, vector<32x32xf32>
    tpu.vector_store %arg11[%c0_30, %c0_31], %45 {strides = array<i32>} : memref<32x32xf32, #tpu.memory_space<vmem>>, vector<32x32xf32>,
    %cst_32 = arith.constant 1.000000e+00 : f32
    %47 = vector.broadcast %cst_32 : f32 to vector<1x32xf32>
    %48 = arith.mulf %45, %45 : vector<32x32xf32>
    %cst_33 = arith.constant dense<0.000000e+00> : vector<1x32xf32>
    %49 = tpu.matmul %47, %48, %cst_33 {dimension_numbers = #tpu.dot_dimension_numbers<[1], [1], [0], [0], [0, 0, 1, 0], [], []>} : vector<1x32xf32>, vector<32x32xf32>, vector<1x32xf32> -> vector<1x32xf32>
    %c0_34 = arith.constant 0 : index
    %c0_35 = arith.constant 0 : index
    %50 = vector.load %arg12[%c0_34, %c0_35] : memref<1x32xf32, #tpu.memory_space<vmem>>, vector<1x32xf32>
    tpu.vector_store %arg12[%c0_34, %c0_35], %49 {strides = array<i32>} : memref<1x32xf32, #tpu.memory_space<vmem>>, vector<1x32xf32>,
    return
  }
}

</mosaic_0001>

<llo_original>
// kernel: tpu_custom_call.1
$region0: #{tpu_custom_call.1}
  #allocation0 [shape = 'u32[]', space=smem, size = 0x4, offset = 0x4, fixed_abs, tag = 'smem constant byte address 0x4 - core index']
  #allocation1 [shape = 'u32[144,128]{1,0:T(1,128)}', space=vmem, size = 0x12000, scoped, tag = 'internal scratch']
  %s0 = inlined_call_operand.vmem [shape: f32[32,8], index: 0, kind: input, shape index: {}]
  %s1 = inlined_call_operand.vmem [shape: f32[8,32], index: 1, kind: input, shape index: {}]
  %s2 = inlined_call_operand.vmem [shape: f32[1,32], index: 2, kind: input, shape index: {}]
  %s3 = inlined_call_operand.vmem [shape: f32[32,64], index: 3, kind: input, shape index: {}]
  %s4 = inlined_call_operand.vmem [shape: f32[1,64], index: 4, kind: input, shape index: {}]
  %s5 = inlined_call_operand.vmem [shape: f32[64,32], index: 5, kind: input, shape index: {}]
  %s6 = inlined_call_operand.vmem [shape: f32[1,32], index: 6, kind: input, shape index: {}]
  %s7 = inlined_call_operand.vmem [shape: f32[1,32], index: 7, kind: input, shape index: {}]
  %s8 = inlined_call_operand.vmem [shape: f32[1,32], index: 8, kind: input, shape index: {}]
  %s9 = inlined_call_operand.vmem [shape: f32[32,32], index: 9, kind: input, shape index: {}]
  %s10 = inlined_call_operand.vmem [shape: f32[1,32], index: 10, kind: input, shape index: {}]
  %s11 = inlined_call_operand.hbm [shape: f32[32,32], index: 11, kind: output, shape index: {0}]
  %s12 = inlined_call_operand.hbm [shape: f32[1,32], index: 12, kind: output, shape index: {1}]
  %13 = xla_tuple %s11, %s12
  %s14 = sld [smem:[#allocation0]]
  $region62: #{tpu_custom_call.1} parent=0
    _
  %s16 = ssub.s32 1, %s14
  %s17 = scalar_select 0, %s16, %s14
  $region1: #{tpu_custom_call.1} parent=0
    #allocation2 [shape = 'u8[16384]{0}', space=vmem, size = 0x4000, scoped, tag = 'output window, operand 0, single buffered']
    #allocation3 [shape = 's32[1]{0}', space=sflag, size = 0x4, scoped, tag = 'scoped memory for tpu_custom_call.1']
    #allocation4 [shape = 'u8[512]{0}', space=vmem, size = 0x400, scoped, tag = 'output window, operand 1, single buffered']
    #allocation5 [shape = 's32[1]{0}', space=sflag, size = 0x4, scoped, tag = 'scoped memory for tpu_custom_call.1']
    %18 = vsyncpa [#allocation3], 0
    %19 = vsyncpa [#allocation5], 0
    // Predicated region
    $region2: #{tpu_custom_call.1} parent=1 // pred_check
      _
    $region3: #{tpu_custom_call.1} parent=1 // pred_check_branch
      %21 = sbr.rel (0) target = $region5
    $region4: #{tpu_custom_call.1} parent=1 // pred_region
      _
    $region5: #{tpu_custom_call.1} parent=1 // pred_fallthru
      _
    // Predicated region
    $region6: #{tpu_custom_call.1} parent=1 // pred_check
      _
    $region7: #{tpu_custom_call.1} parent=1 // pred_check_branch
      %23 = sbr.rel (0) target = $region9
    $region8: #{tpu_custom_call.1} parent=1 // pred_region
      _
    $region9: #{tpu_custom_call.1} parent=1 // pred_fallthru
      _
    // Predicated region
    $region10: #{tpu_custom_call.1} parent=1 // pred_check
      _
    $region11: #{tpu_custom_call.1} parent=1 // pred_check_branch
      %25 = sbr.rel (0) target = $region13
    $region12: #{tpu_custom_call.1} parent=1 // pred_region
      _
    $region13: #{tpu_custom_call.1} parent=1 // pred_fallthru
      _
    // Predicated region
    $region14: #{tpu_custom_call.1} parent=1 // pred_check
      _
    $region15: #{tpu_custom_call.1} parent=1 // pred_check_branch
      %27 = sbr.rel (0) target = $region17
    $region16: #{tpu_custom_call.1} parent=1 // pred_region
      _
    $region17: #{tpu_custom_call.1} parent=1 // pred_fallthru
      _
    // Predicated region
    $region18: #{tpu_custom_call.1} parent=1 // pred_check
      _
    $region19: #{tpu_custom_call.1} parent=1 // pred_check_branch
      %29 = sbr.rel (0) target = $region21
    $region20: #{tpu_custom_call.1} parent=1 // pred_region
      _
    $region21: #{tpu_custom_call.1} parent=1 // pred_fallthru
      _
    // Predicated region
    $region22: #{tpu_custom_call.1} parent=1 // pred_check
      _
    $region23: #{tpu_custom_call.1} parent=1 // pred_check_branch
      %31 = sbr.rel (0) target = $region25
    $region24: #{tpu_custom_call.1} parent=1 // pred_region
      _
    $region25: #{tpu_custom_call.1} parent=1 // pred_fallthru
      _
    // Predicated region
    $region26: #{tpu_custom_call.1} parent=1 // pred_check
      _
    $region27: #{tpu_custom_call.1} parent=1 // pred_check_branch
      %33 = sbr.rel (0) target = $region29
    $region28: #{tpu_custom_call.1} parent=1 // pred_region
      _
    $region29: #{tpu_custom_call.1} parent=1 // pred_fallthru
      _
    // Predicated region
    $region30: #{tpu_custom_call.1} parent=1 // pred_check
      _
    $region31: #{tpu_custom_call.1} parent=1 // pred_check_branch
      %35 = sbr.rel (0) target = $region33
    $region32: #{tpu_custom_call.1} parent=1 // pred_region
      _
    $region33: #{tpu_custom_call.1} parent=1 // pred_fallthru
      _
    // Predicated region
    $region34: #{tpu_custom_call.1} parent=1 // pred_check
      _
    $region35: #{tpu_custom_call.1} parent=1 // pred_check_branch
      %37 = sbr.rel (0) target = $region37
    $region36: #{tpu_custom_call.1} parent=1 // pred_region
      _
    $region37: #{tpu_custom_call.1} parent=1 // pred_fallthru
      _
    // Predicated region
    $region38: #{tpu_custom_call.1} parent=1 // pred_check
      _
    $region39: #{tpu_custom_call.1} parent=1 // pred_check_branch
      %39 = sbr.rel (0) target = $region41
    $region40: #{tpu_custom_call.1} parent=1 // pred_region
      _
    $region41: #{tpu_custom_call.1} parent=1 // pred_fallthru
      _
    // Predicated region
    $region42: #{tpu_custom_call.1} parent=1 // pred_check
      _
    $region43: #{tpu_custom_call.1} parent=1 // pred_check_branch
      %41 = sbr.rel (0) target = $region45
    $region44: #{tpu_custom_call.1} parent=1 // pred_region
      _
    $region45: #{tpu_custom_call.1} parent=1 // pred_fallthru
      _
    %v42 = vld [vmem:[%s0] sm:$0xff]
    %v43 = vld [vmem:[%s0 + $0x8] sm:$0xff]
    %v44 = vld [vmem:[%s0 + $0x10] sm:$0xff]
    %v45 = vld [vmem:[%s0 + $0x18] sm:$0xff]
    %v46 = vld [vmem:[%s1] sm:$0xff]
    %v47 = vld [vmem:[%s2] sm:$0x1]
    %v48 = vld [vmem:[%s3] sm:$0xff]
    %v49 = vld [vmem:[%s3 + $0x8] sm:$0xff]
    %v50 = vld [vmem:[%s3 + $0x10] sm:$0xff]
    %v51 = vld [vmem:[%s3 + $0x18] sm:$0xff]
    %v52 = vld [vmem:[%s4] sm:$0x1]
    %v53 = vld [vmem:[%s5] sm:$0xff]
    %v54 = vld [vmem:[%s5 + $0x8] sm:$0xff]
    %v55 = vld [vmem:[%s5 + $0x10] sm:$0xff]
    %v56 = vld [vmem:[%s5 + $0x18] sm:$0xff]
    %v57 = vld [vmem:[%s5 + $0x20] sm:$0xff]
    %v58 = vld [vmem:[%s5 + $0x28] sm:$0xff]
    %v59 = vld [vmem:[%s5 + $0x30] sm:$0xff]
    %v60 = vld [vmem:[%s5 + $0x38] sm:$0xff]
    %v61 = vld [vmem:[%s6] sm:$0x1]
    %v62 = vld [vmem:[%s7] sm:$0x1]
    %v63 = vld [vmem:[%s8] sm:$0x1]
    %v64 = vld [vmem:[%s9] sm:$0xff]
    %v65 = vld [vmem:[%s9 + $0x8] sm:$0xff]
    %v66 = vld [vmem:[%s9 + $0x10] sm:$0xff]
    %v67 = vld [vmem:[%s9 + $0x18] sm:$0xff]
    %v68 = vld [vmem:[%s10] sm:$0x1]
    %v70 = vlaneseq
    %v71 = vshrl.u32 %v70, 7
    %v72 = vsub.s32 0, %v71
    %v73 = vrot.slane %v47, %v72
    %vm75 = vcmask 64512
    %v77 = vsel %vm75, %v42, 0
    %v80 = vsel %vm75, %v43, 0
    %v83 = vsel %vm75, %v44, 0
    %v86 = vsel %vm75, %v45, 0
    %88 = vmatprep.subr.mxu0 0.0
    %89 = vmatpush1.msra.mxu0 0.0
    %90 = vmatprep.subr.mxu0 0.0
    %91 = vmatpush1.msra.mxu0 0.0
    %92 = vmatprep.subr.mxu0 0.0
    %93 = vmatpush1.msra.mxu0 0.0
    %94 = vmatprep.subr.mxu0 0.0
    %95 = vmatpush1.msra.mxu0 0.0
    %96 = vmatprep.subr.mxu0 0.0
    %97 = vmatpush1.msra.mxu0 0.0
    %98 = vmatprep.subr.mxu0 0.0
    %99 = vmatpush1.msra.mxu0 0.0
    %100 = vmatprep.subr.mxu0 0.0
    %101 = vmatpush1.msra.mxu0 0.0
    %102 = vmatprep.subr.mxu0 0.0
    %103 = vmatpush1.msra.mxu0 0.0
    %104 = vmatprep.subr.mxu0 0.0
    %105 = vmatpush1.msra.mxu0 0.0
    %106 = vmatprep.subr.mxu0 0.0
    %107 = vmatpush1.msra.mxu0 0.0
    %108 = vmatprep.subr.mxu0 0.0
    %109 = vmatpush1.msra.mxu0 0.0
    %110 = vmatprep.subr.mxu0 0.0
    %111 = vmatpush1.msra.mxu0 0.0
    %112 = vmatprep.subr.mxu0 0.0
    %113 = vmatpush1.msra.mxu0 0.0
    %114 = vmatprep.subr.mxu0 0.0
    %115 = vmatpush1.msra.mxu0 0.0
    %116 = vmatprep.subr.mxu0 0.0
    %117 = vmatpush1.msra.mxu0 0.0
    %118 = vmatprep.subr.mxu0 0.0
    %119 = vmatpush1.msra.mxu0 %v46
    %120 = vmatprep.subr.mxu0 0.0
    %121 = vmatpush2.msra.mxu0 0.0
    %122 = vmatprep.subr.mxu0 0.0
    %123 = vmatpush2.msra.mxu0 0.0
    %124 = vmatprep.subr.mxu0 0.0
    %125 = vmatpush2.msra.mxu0 0.0
    %126 = vmatprep.subr.mxu0 0.0
    %127 = vmatpush2.msra.mxu0 0.0
    %128 = vmatprep.subr.mxu0 0.0
    %129 = vmatpush2.msra.mxu0 0.0
    %130 = vmatprep.subr.mxu0 0.0
    %131 = vmatpush2.msra.mxu0 0.0
    %132 = vmatprep.subr.mxu0 0.0
    %133 = vmatpush2.msra.mxu0 0.0
    %134 = vmatprep.subr.mxu0 0.0
    %135 = vmatpush2.msra.mxu0 0.0
    %136 = vmatprep.subr.mxu0 0.0
    %137 = vmatpush2.msra.mxu0 0.0
    %138 = vmatprep.subr.mxu0 0.0
    %139 = vmatpush2.msra.mxu0 0.0
    %140 = vmatprep.subr.mxu0 0.0
    %141 = vmatpush2.msra.mxu0 0.0
    %142 = vmatprep.subr.mxu0 0.0
    %143 = vmatpush2.msra.mxu0 0.0
    %144 = vmatprep.subr.mxu0 0.0
    %145 = vmatpush2.msra.mxu0 0.0
    %146 = vmatprep.subr.mxu0 0.0
    %147 = vmatpush2.msra.mxu0 0.0
    %148 = vmatprep.subr.mxu0 0.0
    %149 = vmatpush2.msra.mxu0 0.0
    %150 = vmatprep.subr.mxu0 0.0
    %151 = vmatpush2.msra.mxu0 0.0
    %152 = vmatprep.mubr.f32.mxu0 0.0
    %153 = vmatmul.mubr.f32.gmra.mxu0 %v77
    %v154 = vpop.f32.mrf.mxu0
    %v155 = vadd.f32 %v73, %v154
    %v156 = vpop.f32.mrf.mxu0
    %157 = vmatprep.mubr.f32.mxu0 0.0
    %158 = vmatmul.mubr.f32.gmra.mxu0 %v80
    %v159 = vpop.f32.mrf.mxu0
    %v160 = vadd.f32 %v73, %v159
    %v161 = vpop.f32.mrf.mxu0
    %162 = vmatprep.mubr.f32.mxu0 0.0
    %163 = vmatmul.mubr.f32.gmra.mxu0 %v83
    %v164 = vpop.f32.mrf.mxu0
    %v165 = vadd.f32 %v73, %v164
    %v166 = vpop.f32.mrf.mxu0
    %167 = vmatprep.mubr.f32.mxu0 0.0
    %168 = vmatmul.mubr.f32.gmra.mxu0 %v86
    %v169 = vpop.f32.mrf.mxu0
    %v170 = vadd.f32 %v73, %v169
    %v171 = vpop.f32.mrf.mxu0
    %172 = vdwg.mxu0
    %v174 = vlaneseq
    %v175 = vshrl.u32 %v174, 7
    %v176 = vsub.s32 0, %v175
    %v177 = vrot.slane %v52, %v176
    %vm179 = vcmask 261120
    %v181 = vsel %vm179, %v155, 0
    %v184 = vsel %vm179, %v160, 0
    %v187 = vsel %vm179, %v165, 0
    %v190 = vsel %vm179, %v170, 0
    %192 = vmatprep.subr.mxu0 0.0
    %193 = vmatpush1.msra.mxu0 0.0
    %194 = vmatprep.subr.mxu0 0.0
    %195 = vmatpush1.msra.mxu0 0.0
    %196 = vmatprep.subr.mxu0 0.0
    %197 = vmatpush1.msra.mxu0 0.0
    %198 = vmatprep.subr.mxu0 0.0
    %199 = vmatpush1.msra.mxu0 0.0
    %200 = vmatprep.subr.mxu0 0.0
    %201 = vmatpush1.msra.mxu0 0.0
    %202 = vmatprep.subr.mxu0 0.0
    %203 = vmatpush1.msra.mxu0 0.0
    %204 = vmatprep.subr.mxu0 0.0
    %205 = vmatpush1.msra.mxu0 0.0
    %206 = vmatprep.subr.mxu0 0.0
    %207 = vmatpush1.msra.mxu0 0.0
    %208 = vmatprep.subr.mxu0 0.0
    %209 = vmatpush1.msra.mxu0 0.0
    %210 = vmatprep.subr.mxu0 0.0
    %211 = vmatpush1.msra.mxu0 0.0
    %212 = vmatprep.subr.mxu0 0.0
    %213 = vmatpush1.msra.mxu0 0.0
    %214 = vmatprep.subr.mxu0 0.0
    %215 = vmatpush1.msra.mxu0 0.0
    %216 = vmatprep.subr.mxu0 0.0
    %217 = vmatpush1.msra.mxu0 %v51
    %218 = vmatprep.subr.mxu0 0.0
    %219 = vmatpush1.msra.mxu0 %v50
    %220 = vmatprep.subr.mxu0 0.0
    %221 = vmatpush1.msra.mxu0 %v49
    %222 = vmatprep.subr.mxu0 0.0
    %223 = vmatpush1.msra.mxu0 %v48
    %224 = vmatprep.subr.mxu0 0.0
    %225 = vmatpush2.msra.mxu0 0.0
    %226 = vmatprep.subr.mxu0 0.0
    %227 = vmatpush2.msra.mxu0 0.0
    %228 = vmatprep.subr.mxu0 0.0
    %229 = vmatpush2.msra.mxu0 0.0
    %230 = vmatprep.subr.mxu0 0.0
    %231 = vmatpush2.msra.mxu0 0.0
    %232 = vmatprep.subr.mxu0 0.0
    %233 = vmatpush2.msra.mxu0 0.0
    %234 = vmatprep.subr.mxu0 0.0
    %235 = vmatpush2.msra.mxu0 0.0
    %236 = vmatprep.subr.mxu0 0.0
    %237 = vmatpush2.msra.mxu0 0.0
    %238 = vmatprep.subr.mxu0 0.0
    %239 = vmatpush2.msra.mxu0 0.0
    %240 = vmatprep.subr.mxu0 0.0
    %241 = vmatpush2.msra.mxu0 0.0
    %242 = vmatprep.subr.mxu0 0.0
    %243 = vmatpush2.msra.mxu0 0.0
    %244 = vmatprep.subr.mxu0 0.0
    %245 = vmatpush2.msra.mxu0 0.0
    %246 = vmatprep.subr.mxu0 0.0
    %247 = vmatpush2.msra.mxu0 0.0
    %248 = vmatprep.subr.mxu0 0.0
    %249 = vmatpush2.msra.mxu0 0.0
    %250 = vmatprep.subr.mxu0 0.0
    %251 = vmatpush2.msra.mxu0 0.0
    %252 = vmatprep.subr.mxu0 0.0
    %253 = vmatpush2.msra.mxu0 0.0
    %254 = vmatprep.subr.mxu0 0.0
    %255 = vmatpush2.msra.mxu0 0.0
    %256 = vmatprep.mubr.f32.mxu0 0.0
    %257 = vmatmul.mubr.f32.gmra.mxu0 %v181
    %v258 = vpop.f32.mrf.mxu0
    %v259 = vadd.f32 %v177, %v258
    %v260 = vpop.f32.mrf.mxu0
    %261 = vmatprep.mubr.f32.mxu0 0.0
    %262 = vmatmul.mubr.f32.gmra.mxu0 %v184
    %v263 = vpop.f32.mrf.mxu0
    %v264 = vadd.f32 %v177, %v263
    %v265 = vpop.f32.mrf.mxu0
    %266 = vmatprep.mubr.f32.mxu0 0.0
    %267 = vmatmul.mubr.f32.gmra.mxu0 %v187
    %v268 = vpop.f32.mrf.mxu0
    %v269 = vadd.f32 %v177, %v268
    %v270 = vpop.f32.mrf.mxu0
    %271 = vmatprep.mubr.f32.mxu0 0.0
    %272 = vmatmul.mubr.f32.gmra.mxu0 %v190
    %v273 = vpop.f32.mrf.mxu0
    %v274 = vadd.f32 %v177, %v273
    %v275 = vpop.f32.mrf.mxu0
    %276 = vdwg.mxu0
    %v277 = vmax.f32 %v259, 0.0
    %v278 = vmax.f32 %v264, 0.0
    %v279 = vmax.f32 %v269, 0.0
    %v280 = vmax.f32 %v274, 0.0
    %vm281 = vcmask 523264
    %v283 = vsel %vm281, %v277, 0
    %v286 = vsel %vm281, %v278, 0
    %v289 = vsel %vm281, %v279, 0
    %v292 = vsel %vm281, %v280, 0
    %294 = vmatprep.subr.mxu0 0.0
    %295 = vmatpush1.msra.mxu0 0.0
    %296 = vmatprep.subr.mxu0 0.0
    %297 = vmatpush1.msra.mxu0 0.0
    %298 = vmatprep.subr.mxu0 0.0
    %299 = vmatpush1.msra.mxu0 0.0
    %300 = vmatprep.subr.mxu0 0.0
    %301 = vmatpush1.msra.mxu0 0.0
    %302 = vmatprep.subr.mxu0 0.0
    %303 = vmatpush1.msra.mxu0 0.0
    %304 = vmatprep.subr.mxu0 0.0
    %305 = vmatpush1.msra.mxu0 0.0
    %306 = vmatprep.subr.mxu0 0.0
    %307 = vmatpush1.msra.mxu0 0.0
    %308 = vmatprep.subr.mxu0 0.0
    %309 = vmatpush1.msra.mxu0 0.0
    %310 = vmatprep.subr.mxu0 0.0
    %311 = vmatpush1.msra.mxu0 %v60
    %312 = vmatprep.subr.mxu0 0.0
    %313 = vmatpush1.msra.mxu0 %v59
    %314 = vmatprep.subr.mxu0 0.0
    %315 = vmatpush1.msra.mxu0 %v58
    %316 = vmatprep.subr.mxu0 0.0
    %317 = vmatpush1.msra.mxu0 %v57
    %318 = vmatprep.subr.mxu0 0.0
    %319 = vmatpush1.msra.mxu0 %v56
    %320 = vmatprep.subr.mxu0 0.0
    %321 = vmatpush1.msra.mxu0 %v55
    %322 = vmatprep.subr.mxu0 0.0
    %323 = vmatpush1.msra.mxu0 %v54
    %324 = vmatprep.subr.mxu0 0.0
    %325 = vmatpush1.msra.mxu0 %v53
    %326 = vmatprep.subr.mxu0 0.0
    %327 = vmatpush2.msra.mxu0 0.0
    %328 = vmatprep.subr.mxu0 0.0
    %329 = vmatpush2.msra.mxu0 0.0
    %330 = vmatprep.subr.mxu0 0.0
    %331 = vmatpush2.msra.mxu0 0.0
    %332 = vmatprep.subr.mxu0 0.0
    %333 = vmatpush2.msra.mxu0 0.0
    %334 = vmatprep.subr.mxu0 0.0
    %335 = vmatpush2.msra.mxu0 0.0
    %336 = vmatprep.subr.mxu0 0.0
    %337 = vmatpush2.msra.mxu0 0.0
    %338 = vmatprep.subr.mxu0 0.0
    %339 = vmatpush2.msra.mxu0 0.0
    %340 = vmatprep.subr.mxu0 0.0
    %341 = vmatpush2.msra.mxu0 0.0
    %342 = vmatprep.subr.mxu0 0.0
    %343 = vmatpush2.msra.mxu0 0.0
    %344 = vmatprep.subr.mxu0 0.0
    %345 = vmatpush2.msra.mxu0 0.0
    %346 = vmatprep.subr.mxu0 0.0
    %347 = vmatpush2.msra.mxu0 0.0
    %348 = vmatprep.subr.mxu0 0.0
    %349 = vmatpush2.msra.mxu0 0.0
    %350 = vmatprep.subr.mxu0 0.0
    %351 = vmatpush2.msra.mxu0 0.0
    %352 = vmatprep.subr.mxu0 0.0
    %353 = vmatpush2.msra.mxu0 0.0
    %354 = vmatprep.subr.mxu0 0.0
    %355 = vmatpush2.msra.mxu0 0.0
    %356 = vmatprep.subr.mxu0 0.0
    %357 = vmatpush2.msra.mxu0 0.0
    %358 = vmatprep.mubr.f32.mxu0 0.0
    %359 = vmatmul.mubr.f32.gmra.mxu0 %v283
    %v360 = vpop.f32.mrf.mxu0
    %v361 = vadd.f32 0.0, %v360
    %v362 = vpop.f32.mrf.mxu0
    %363 = vmatprep.mubr.f32.mxu0 0.0
    %364 = vmatmul.mubr.f32.gmra.mxu0 %v286
    %v365 = vpop.f32.mrf.mxu0
    %v366 = vadd.f32 0.0, %v365
    %v367 = vpop.f32.mrf.mxu0
    %368 = vmatprep.mubr.f32.mxu0 0.0
    %369 = vmatmul.mubr.f32.gmra.mxu0 %v289
    %v370 = vpop.f32.mrf.mxu0
    %v371 = vadd.f32 0.0, %v370
    %v372 = vpop.f32.mrf.mxu0
    %373 = vmatprep.mubr.f32.mxu0 0.0
    %374 = vmatmul.mubr.f32.gmra.mxu0 %v292
    %v375 = vpop.f32.mrf.mxu0
    %v376 = vadd.f32 0.0, %v375
    %v377 = vpop.f32.mrf.mxu0
    %378 = vdwg.mxu0
    %v379 = vadd.f32 %v155, %v361
    %v380 = vadd.f32 %v160, %v366
    %v381 = vadd.f32 %v165, %v371
    %v382 = vadd.f32 %v170, %v376
    %v384 = vlaneseq
    %v385 = vshrl.u32 %v384, 7
    %v386 = vsub.s32 0, %v385
    %v387 = vrot.slane %v61, %v386
    %v389 = vadd.f32 %v379, %v387
    %v390 = vadd.f32 %v380, %v387
    %v391 = vadd.f32 %v381, %v387
    %v392 = vadd.f32 %v382, %v387
    %v393 = vsel %vm179, %v389, 0.0
    %394 = vadd.xlane.f32.xlu0 %v393
    %v395 = vpop.xlane.xlu0 %394
    %v396 = vsel %vm179, %v390, 0.0
    %397 = vadd.xlane.f32.xlu0 %v396
    %v398 = vpop.xlane.xlu0 %397
    %v399 = vsel %vm179, %v391, 0.0
    %400 = vadd.xlane.f32.xlu0 %v399
    %v401 = vpop.xlane.xlu0 %400
    %v402 = vsel %vm179, %v392, 0.0
    %403 = vadd.xlane.f32.xlu0 %v402
    %v404 = vpop.xlane.xlu0 %403
    %v405 = vrcp.pop 32.0
    %v406 = vmul.f32 %v395, %v405
    %v407 = vmul.f32 %v398, %v405
    %v408 = vmul.f32 %v401, %v405
    %v409 = vmul.f32 %v404, %v405
    %v410 = vsub.f32 %v389, %v406
    %v411 = vsub.f32 %v390, %v407
    %v412 = vsub.f32 %v391, %v408
    %v413 = vsub.f32 %v392, %v409
    %v414 = vmul.f32 %v410, %v410
    %v415 = vmul.f32 %v411, %v411
    %v416 = vmul.f32 %v412, %v412
    %v417 = vmul.f32 %v413, %v413
    %v418 = vsel %vm179, %v414, 0.0
    %419 = vadd.xlane.f32.xlu0 %v418
    %v420 = vpop.xlane.xlu0 %419
    %v421 = vsel %vm179, %v415, 0.0
    %422 = vadd.xlane.f32.xlu0 %v421
    %v423 = vpop.xlane.xlu0 %422
    %v424 = vsel %vm179, %v416, 0.0
    %425 = vadd.xlane.f32.xlu0 %v424
    %v426 = vpop.xlane.xlu0 %425
    %v427 = vsel %vm179, %v417, 0.0
    %428 = vadd.xlane.f32.xlu0 %v427
    %v429 = vpop.xlane.xlu0 %428
    %v430 = vmul.f32 %v420, %v405
    %v431 = vmul.f32 %v423, %v405
    %v432 = vmul.f32 %v426, %v405
    %v433 = vmul.f32 %v429, %v405
    %v434 = vadd.f32 %v430, 1e-05
    %v435 = vadd.f32 %v431, 1e-05
    %v436 = vadd.f32 %v432, 1e-05
    %v437 = vadd.f32 %v433, 1e-05
    %v438 = vrsqrt.pop %v434
    %v439 = vrsqrt.pop %v435
    %v440 = vrsqrt.pop %v436
    %v441 = vrsqrt.pop %v437
    %v442 = vmul.f32 %v410, %v438
    %v443 = vmul.f32 %v411, %v439
    %v444 = vmul.f32 %v412, %v440
    %v445 = vmul.f32 %v413, %v441
    %v447 = vlaneseq
    %v448 = vshrl.u32 %v447, 7
    %v449 = vsub.s32 0, %v448
    %v450 = vrot.slane %v62, %v449
    %v452 = vmul.f32 %v442, %v450
    %v453 = vmul.f32 %v443, %v450
    %v454 = vmul.f32 %v444, %v450
    %v455 = vmul.f32 %v445, %v450
    %v457 = vlaneseq
    %v458 = vshrl.u32 %v457, 7
    %v459 = vsub.s32 0, %v458
    %v460 = vrot.slane %v63, %v459
    %v462 = vadd.f32 %v452, %v460
    %v463 = vadd.f32 %v453, %v460
    %v464 = vadd.f32 %v454, %v460
    %v465 = vadd.f32 %v455, %v460
    %v467 = vlaneseq
    %v468 = vshrl.u32 %v467, 7
    %v469 = vsub.s32 0, %v468
    %v470 = vrot.slane %v68, %v469
    %v473 = vsel %vm179, %v462, 0
    %v476 = vsel %vm179, %v463, 0
    %v479 = vsel %vm179, %v464, 0
    %v482 = vsel %vm179, %v465, 0
    %484 = vmatprep.subr.mxu0 0.0
    %485 = vmatpush1.msra.mxu0 0.0
    %486 = vmatprep.subr.mxu0 0.0
    %487 = vmatpush1.msra.mxu0 0.0
    %488 = vmatprep.subr.mxu0 0.0
    %489 = vmatpush1.msra.mxu0 0.0
    %490 = vmatprep.subr.mxu0 0.0
    %491 = vmatpush1.msra.mxu0 0.0
    %492 = vmatprep.subr.mxu0 0.0
    %493 = vmatpush1.msra.mxu0 0.0
    %494 = vmatprep.subr.mxu0 0.0
    %495 = vmatpush1.msra.mxu0 0.0
    %496 = vmatprep.subr.mxu0 0.0
    %497 = vmatpush1.msra.mxu0 0.0
    %498 = vmatprep.subr.mxu0 0.0
    %499 = vmatpush1.msra.mxu0 0.0
    %500 = vmatprep.subr.mxu0 0.0
    %501 = vmatpush1.msra.mxu0 0.0
    %502 = vmatprep.subr.mxu0 0.0
    %503 = vmatpush1.msra.mxu0 0.0
    %504 = vmatprep.subr.mxu0 0.0
    %505 = vmatpush1.msra.mxu0 0.0
    %506 = vmatprep.subr.mxu0 0.0
    %507 = vmatpush1.msra.mxu0 0.0
    %508 = vmatprep.subr.mxu0 0.0
    %509 = vmatpush1.msra.mxu0 %v67
    %510 = vmatprep.subr.mxu0 0.0
    %511 = vmatpush1.msra.mxu0 %v66
    %512 = vmatprep.subr.mxu0 0.0
    %513 = vmatpush1.msra.mxu0 %v65
    %514 = vmatprep.subr.mxu0 0.0
    %515 = vmatpush1.msra.mxu0 %v64
    %516 = vmatprep.subr.mxu0 0.0
    %517 = vmatpush2.msra.mxu0 0.0
    %518 = vmatprep.subr.mxu0 0.0
    %519 = vmatpush2.msra.mxu0 0.0
    %520 = vmatprep.subr.mxu0 0.0
    %521 = vmatpush2.msra.mxu0 0.0
    %522 = vmatprep.subr.mxu0 0.0
    %523 = vmatpush2.msra.mxu0 0.0
    %524 = vmatprep.subr.mxu0 0.0
    %525 = vmatpush2.msra.mxu0 0.0
    %526 = vmatprep.subr.mxu0 0.0
    %527 = vmatpush2.msra.mxu0 0.0
    %528 = vmatprep.subr.mxu0 0.0
    %529 = vmatpush2.msra.mxu0 0.0
    %530 = vmatprep.subr.mxu0 0.0
    %531 = vmatpush2.msra.mxu0 0.0
    %532 = vmatprep.subr.mxu0 0.0
    %533 = vmatpush2.msra.mxu0 0.0
    %534 = vmatprep.subr.mxu0 0.0
    %535 = vmatpush2.msra.mxu0 0.0
    %536 = vmatprep.subr.mxu0 0.0
    %537 = vmatpush2.msra.mxu0 0.0
    %538 = vmatprep.subr.mxu0 0.0
    %539 = vmatpush2.msra.mxu0 0.0
    %540 = vmatprep.subr.mxu0 0.0
    %541 = vmatpush2.msra.mxu0 0.0
    %542 = vmatprep.subr.mxu0 0.0
    %543 = vmatpush2.msra.mxu0 0.0
    %544 = vmatprep.subr.mxu0 0.0
    %545 = vmatpush2.msra.mxu0 0.0
    %546 = vmatprep.subr.mxu0 0.0
    %547 = vmatpush2.msra.mxu0 0.0
    %548 = vmatprep.mubr.f32.mxu0 0.0
    %549 = vmatmul.mubr.f32.gmra.mxu0 %v473
    %v550 = vpop.f32.mrf.mxu0
    %v551 = vadd.f32 %v470, %v550
    %v552 = vpop.f32.mrf.mxu0
    %553 = vmatprep.mubr.f32.mxu0 0.0
    %554 = vmatmul.mubr.f32.gmra.mxu0 %v476
    %v555 = vpop.f32.mrf.mxu0
    %v556 = vadd.f32 %v470, %v555
    %v557 = vpop.f32.mrf.mxu0
    %558 = vmatprep.mubr.f32.mxu0 0.0
    %559 = vmatmul.mubr.f32.gmra.mxu0 %v479
    %v560 = vpop.f32.mrf.mxu0
    %v561 = vadd.f32 %v470, %v560
    %v562 = vpop.f32.mrf.mxu0
    %563 = vmatprep.mubr.f32.mxu0 0.0
    %564 = vmatmul.mubr.f32.gmra.mxu0 %v482
    %v565 = vpop.f32.mrf.mxu0
    %v566 = vadd.f32 %v470, %v565
    %v567 = vpop.f32.mrf.mxu0
    %568 = vdwg.mxu0
    %569 = vst.msk [vmem:[#allocation2] sm:$0xff] %vm179, %v551
    %570 = vst.msk [vmem:[#allocation2 + $0x8] sm:$0xff] %vm179, %v556
    %571 = vst.msk [vmem:[#allocation2 + $0x10] sm:$0xff] %vm179, %v561
    %572 = vst.msk [vmem:[#allocation2 + $0x18] sm:$0xff] %vm179, %v566
    %v573 = vmul.f32 %v551, %v551
    %v574 = vmul.f32 %v556, %v556
    %v575 = vmul.f32 %v561, %v561
    %v576 = vmul.f32 %v566, %v566
    %v578 = vsel %vm179, 1.0, 0
    %v581 = vsel %vm179, %v573, 0
    %v584 = vsel %vm179, %v574, 0
    %v587 = vsel %vm179, %v575, 0
    %v590 = vsel %vm179, %v576, 0
    %592 = vmatprep.subr.mxu0 0.0
    %593 = vmatpush1.xpose.msra.mxu0 0.0
    %594 = vmatprep.subr.mxu0 0.0
    %595 = vmatpush1.xpose.msra.mxu0 0.0
    %596 = vmatprep.subr.mxu0 0.0
    %597 = vmatpush1.xpose.msra.mxu0 0.0
    %598 = vmatprep.subr.mxu0 0.0
    %599 = vmatpush1.xpose.msra.mxu0 0.0
    %600 = vmatprep.subr.mxu0 0.0
    %601 = vmatpush1.xpose.msra.mxu0 0.0
    %602 = vmatprep.subr.mxu0 0.0
    %603 = vmatpush1.xpose.msra.mxu0 0.0
    %604 = vmatprep.subr.mxu0 0.0
    %605 = vmatpush1.xpose.msra.mxu0 0.0
    %606 = vmatprep.subr.mxu0 0.0
    %607 = vmatpush1.xpose.msra.mxu0 0.0
    %608 = vmatprep.subr.mxu0 0.0
    %609 = vmatpush1.xpose.msra.mxu0 0.0
    %610 = vmatprep.subr.mxu0 0.0
    %611 = vmatpush1.xpose.msra.mxu0 0.0
    %612 = vmatprep.subr.mxu0 0.0
    %613 = vmatpush1.xpose.msra.mxu0 0.0
    %614 = vmatprep.subr.mxu0 0.0
    %615 = vmatpush1.xpose.msra.mxu0 0.0
    %616 = vmatprep.subr.mxu0 0.0
    %617 = vmatpush1.xpose.msra.mxu0 %v590
    %618 = vmatprep.subr.mxu0 0.0
    %619 = vmatpush1.xpose.msra.mxu0 %v587
    %620 = vmatprep.subr.mxu0 0.0
    %621 = vmatpush1.xpose.msra.mxu0 %v584
    %622 = vmatprep.subr.mxu0 0.0
    %623 = vmatpush1.xpose.msra.mxu0 %v581
    %624 = vmatprep.subr.mxu0 0.0
    %625 = vmatpush2.xpose.msra.mxu0 0.0
    %626 = vmatprep.subr.mxu0 0.0
    %627 = vmatpush2.xpose.msra.mxu0 0.0
    %628 = vmatprep.subr.mxu0 0.0
    %629 = vmatpush2.xpose.msra.mxu0 0.0
    %630 = vmatprep.subr.mxu0 0.0
    %631 = vmatpush2.xpose.msra.mxu0 0.0
    %632 = vmatprep.subr.mxu0 0.0
    %633 = vmatpush2.xpose.msra.mxu0 0.0
    %634 = vmatprep.subr.mxu0 0.0
    %635 = vmatpush2.xpose.msra.mxu0 0.0
    %636 = vmatprep.subr.mxu0 0.0
    %637 = vmatpush2.xpose.msra.mxu0 0.0
    %638 = vmatprep.subr.mxu0 0.0
    %639 = vmatpush2.xpose.msra.mxu0 0.0
    %640 = vmatprep.subr.mxu0 0.0
    %641 = vmatpush2.xpose.msra.mxu0 0.0
    %642 = vmatprep.subr.mxu0 0.0
    %643 = vmatpush2.xpose.msra.mxu0 0.0
    %644 = vmatprep.subr.mxu0 0.0
    %645 = vmatpush2.xpose.msra.mxu0 0.0
    %646 = vmatprep.subr.mxu0 0.0
    %647 = vmatpush2.xpose.msra.mxu0 0.0
    %648 = vmatprep.subr.mxu0 0.0
    %649 = vmatpush2.xpose.msra.mxu0 0.0
    %650 = vmatprep.subr.mxu0 0.0
    %651 = vmatpush2.xpose.msra.mxu0 0.0
    %652 = vmatprep.subr.mxu0 0.0
    %653 = vmatpush2.xpose.msra.mxu0 0.0
    %654 = vmatprep.subr.mxu0 0.0
    %655 = vmatpush2.xpose.msra.mxu0 0.0
    %656 = vmatprep.mubr.f32.mxu0 0.0
    %657 = vmatmul.mubr.f32.gmra.mxu0 %v578
    %v658 = vpop.f32.mrf.mxu0
    %v659 = vadd.f32 0.0, %v658
    %v660 = vpop.f32.mrf.mxu0
    %661 = vdwg.mxu0
    %vm662 = vcmask 253952
    %663 = vst.msk [vmem:[#allocation4] sm:$0x1] %vm662, %v659
    // Predicated region
    $region46: #{tpu_custom_call.1} parent=1 // pred_check
      _
    $region47: #{tpu_custom_call.1} parent=1 // pred_check_branch
      %665 = sbr.rel (0) target = $region49
    $region48: #{tpu_custom_call.1} parent=1 // pred_region
      %s667 = ssub.s32 512, 512
      %668 = vsyncadd [#allocation3], %s667
      %s669 = sshll.u32 [#allocation2], 4
      %s670 = int_to_ptr.vmem [resolvable:$true] %s669
      %675 = dma.vmem_to_hbm [thread:$0]  %s670, 512, %s11, [#allocation3], 128, 128, 8
    $region49: #{tpu_custom_call.1} parent=1 // pred_fallthru
      _
    // Predicated region
    $region50: #{tpu_custom_call.1} parent=1 // pred_check
      _
    $region51: #{tpu_custom_call.1} parent=1 // pred_check_branch
      %677 = sbr.rel (0) target = $region53
    $region52: #{tpu_custom_call.1} parent=1 // pred_region
      %s679 = ssub.s32 16, 16
      %680 = vsyncadd [#allocation5], %s679
      %s682 = sshll.u32 [#allocation4], 4
      %s683 = int_to_ptr.vmem [resolvable:$true] %s682
      %685 = dma.vmem_to_hbm [thread:$0]  %s683, 16, %s12, [#allocation5]
    $region53: #{tpu_custom_call.1} parent=1 // pred_fallthru
      _
    // Predicated region
    $region54: #{tpu_custom_call.1} parent=1 // pred_check
      _
    $region55: #{tpu_custom_call.1} parent=1 // pred_check_branch
      %687 = sbr.rel (0) target = $region57
    $region56: #{tpu_custom_call.1} parent=1 // pred_region
      %688 = dma.done [#allocation3], 512
    $region57: #{tpu_custom_call.1} parent=1 // pred_fallthru
      _
    // Predicated region
    $region58: #{tpu_custom_call.1} parent=1 // pred_check
      _
    $region59: #{tpu_custom_call.1} parent=1 // pred_check_branch
      %690 = sbr.rel (0) target = $region61
    $region60: #{tpu_custom_call.1} parent=1 // pred_region
      %691 = dma.done [#allocation5], 16
    $region61: #{tpu_custom_call.1} parent=1 // pred_fallthru
      _
    %692 = vsyncpa [#allocation3], 1
    %693 = vsyncpa [#allocation5], 1

</llo_original>
